<compile_context>
chip_gen: v5e
topology: v5e:2x2
jax: 0.10.0
libtpu: 0.0.40
codegen_flags: <defaults>
</compile_context>

<pallas_src>
import jax
import jax.numpy as jnp
from jax.experimental import pallas as pl
from jax.experimental.pallas import tpu as pltpu


DIM_IN = 256          # feature width of the encoder output
HIDDEN = 64           # logical hidden width of the MLP head
NUM_CLASSES = 4       # logical number of classes
HIDDEN_PAD = 128      # hidden width padded to one full lane register (MXU-friendly)
NC_PAD = 128          # second matmul computed at full lane width
NC_STORE = 8          # narrow stored class width (== full last dim of the outputs)
MAX_TB = 4096         # max batch tile (rows); ~8-9 MiB double-buffered VMEM


def _round_up(x, m):
    return ((x + m - 1) // m) * m


def _mlp_softmax_kernel(x_ref, w1_ref, b1_ref, w2_ref, b2_ref,
                        probs_ref, out_ref):
    """One batch tile of the MLP head + softmax.

    x_ref:     [TB, 256]  last-timestep features (strided DMA out of trajs)
    w1_ref:    [256, 128] Linear(256,64) weight, zero-padded to 128 lanes
    b1_ref:    [1, 128]
    w2_ref:    [128, 128] Linear(64,4) weight, zero-padded
    b2_ref:    [1, 128]
    probs_ref: [TB, 8]    softmax(out)  (only the first 4 lanes are real)
    out_ref:   [TB, 8]    logits        (only the first 4 lanes are real)
    """
    x = x_ref[...]

    # Linear(256, 64) + ReLU  (MXU matmul, f32 accumulation; padded lanes stay 0)
    h = jnp.dot(x, w1_ref[...], preferred_element_type=jnp.float32)
    h = jnp.maximum(h + b1_ref[...], 0.0)

    # Linear(64, 4) at full 128-lane MXU width; keep only the narrow real slab.
    logits = jnp.dot(h, w2_ref[...], preferred_element_type=jnp.float32)
    logits = logits + b2_ref[...]
    logits_n = logits[:, :NC_STORE]                      # [TB, 8]
    out_ref[...] = logits_n.astype(out_ref.dtype)

    # Row-wise softmax over the REAL classes only: padded lanes -> -inf -> exp 0.
    col = jax.lax.broadcasted_iota(jnp.int32, logits_n.shape, 1)
    masked = jnp.where(col < NUM_CLASSES, logits_n, -jnp.inf)
    m = jnp.max(masked, axis=-1, keepdims=True)
    e = jnp.exp(masked - m)
    denom = jnp.sum(e, axis=-1, keepdims=True)
    probs_ref[...] = (e / denom).astype(probs_ref.dtype)  # exact: rows sum to 1


@jax.jit
def traj_simi_classification(trajs, w1, b1, w2, b2):
    """trajs: [B, T, 256] float32.  Returns (softmax(out), out), both [B, 4]."""
    B, T, D = trajs.shape
    assert D == DIM_IN

    # Free (layout-preserving) reshape: trajs[:, -1, :] becomes column-block
    # (T-1) of a [B, T*D] array, so the BlockSpec DMA pulls exactly those
    # strided rows from HBM -- no wrapper-side slice copy.
    trajs2d = trajs.reshape(B, T * D)

    # Zero-pad the (tiny) weights so both matmuls run at full 128-lane width.
    w1p = jnp.pad(w1, ((0, 0), (0, HIDDEN_PAD - HIDDEN)))
    b1p = jnp.pad(b1, (0, HIDDEN_PAD - HIDDEN)).reshape(1, HIDDEN_PAD)
    w2p = jnp.pad(w2, ((0, HIDDEN_PAD - HIDDEN), (0, NC_PAD - NUM_CLASSES)))
    b2p = jnp.pad(b2, (0, NC_PAD - NUM_CLASSES)).reshape(1, NC_PAD)

    # Batch tiling:
    #   * tiny B: single full block (always a legal block shape).
    #   * otherwise: at least 2 grid steps (so v7x's 2 TensorCores both get
    #     work and the pipeline has something to overlap), capped at MAX_TB
    #     rows (~4 MiB/step input) to amortize per-step overhead.
    if B <= 16:
        tb = B
    else:
        tb = min(MAX_TB, max(8, _round_up(pl.cdiv(B, 2), 8)))
    grid = (pl.cdiv(B, tb),)

    probs_n, out_n = pl.pallas_call(
        _mlp_softmax_kernel,
        out_shape=(
            jax.ShapeDtypeStruct((B, NC_STORE), jnp.float32),
            jax.ShapeDtypeStruct((B, NC_STORE), jnp.float32),
        ),
        grid=grid,
        in_specs=[
            # Column-block (T-1) of trajs2d == trajs[:, -1, :] for this batch tile.
            pl.BlockSpec((tb, DIM_IN), lambda i: (i, T - 1)),
            # Weights/biases: constant index maps -> VMEM-resident across steps.
            pl.BlockSpec((DIM_IN, HIDDEN_PAD), lambda i: (0, 0)),
            pl.BlockSpec((1, HIDDEN_PAD), lambda i: (0, 0)),
            pl.BlockSpec((HIDDEN_PAD, NC_PAD), lambda i: (0, 0)),
            pl.BlockSpec((1, NC_PAD), lambda i: (0, 0)),
        ],
        out_specs=(
            # Narrow outputs: block last dim == full array last dim (8) -> legal.
            pl.BlockSpec((tb, NC_STORE), lambda i: (i, 0)),
            pl.BlockSpec((tb, NC_STORE), lambda i: (i, 0)),
        ),
        compiler_params=pltpu.CompilerParams(
            dimension_semantics=("parallel",),
        ),
    )(trajs2d, w1p, b1p, w2p, b2p)

    # Drop the 4 spare class lanes (tiny, fused into the same XLA program).
    return probs_n[:, :NUM_CLASSES], out_n[:, :NUM_CLASSES]


def _ref_forward(trajs, w1, b1, w2, b2):
    """Pure-JAX reference mirroring the PyTorch module."""
    h_n = trajs[:, -1, :]
    h = jnp.maximum(h_n @ w1 + b1, 0.0)
    out = h @ w2 + b2
    return jax.nn.softmax(out, axis=1), out


if __name__ == "__main__":
    key = jax.random.PRNGKey(0)
    k_traj, k_w1, k_b1, k_w2, k_b2 = jax.random.split(key, 5)

    B, T = 8, 8  # small batch / sequence length; feature dim fixed at 256
    trajs = jax.random.normal(k_traj, (B, T, DIM_IN), dtype=jnp.float32)

    # Deterministic parameter init (matches nn.Linear shapes; kaiming-ish scale).
    w1 = jax.random.normal(k_w1, (DIM_IN, HIDDEN), dtype=jnp.float32) * (1.0 / DIM_IN ** 0.5)
    b1 = jax.random.normal(k_b1, (HIDDEN,), dtype=jnp.float32) * 0.01
    w2 = jax.random.normal(k_w2, (HIDDEN, NUM_CLASSES), dtype=jnp.float32) * (1.0 / HIDDEN ** 0.5)
    b2 = jax.random.normal(k_b2, (NUM_CLASSES,), dtype=jnp.float32) * 0.01

    probs, out = jax.block_until_ready(
        traj_simi_classification(trajs, w1, b1, w2, b2)
    )

    # Correctness check against pure-JAX reference.
    probs_ref, out_ref = _ref_forward(trajs, w1, b1, w2, b2)
    assert probs.shape == (B, NUM_CLASSES) and out.shape == (B, NUM_CLASSES)
    assert jnp.allclose(out, out_ref, atol=2e-4, rtol=2e-4)
    assert jnp.allclose(probs, probs_ref, atol=2e-4, rtol=2e-4)
    # Exact divide in the softmax epilogue -> rows sum to 1 to f32 rounding.
    assert jnp.allclose(jnp.sum(probs, axis=1), 1.0, atol=1e-5)

    print("KERNEL_OK")
</pallas_src>

<mosaic_0001>
module attributes {stable_mosaic.version = 11 : i64} {
  func.func @_mlp_softmax_kernel(%arg0: i32, %arg1: memref<8x256xf32, #tpu.memory_space<vmem>>, %arg2: memref<256x128xf32, #tpu.memory_space<vmem>>, %arg3: memref<1x128xf32, #tpu.memory_space<vmem>>, %arg4: memref<128x128xf32, #tpu.memory_space<vmem>>, %arg5: memref<1x128xf32, #tpu.memory_space<vmem>>, %arg6: memref<8x8xf32, #tpu.memory_space<vmem>>, %arg7: memref<8x8xf32, #tpu.memory_space<vmem>>) attributes {dimension_semantics = [#tpu.dimension_semantics<parallel>], iteration_bounds = array<i64: 1>, scalar_prefetch = 0 : i64, scratch_operands = 0 : i64, tpu.core_type = #tpu.core_type<tc>, window_params = [{transform_indices = @transform_0, window_bounds = array<i64: 8, 256>}, {pipeline_mode = #tpu.pipeline_mode<synchronous>, transform_indices = @transform_1, window_bounds = array<i64: 256, 128>}, {pipeline_mode = #tpu.pipeline_mode<synchronous>, transform_indices = @transform_2, window_bounds = array<i64: 1, 128>}, {pipeline_mode = #tpu.pipeline_mode<synchronous>, transform_indices = @transform_3, window_bounds = array<i64: 128, 128>}, {pipeline_mode = #tpu.pipeline_mode<synchronous>, transform_indices = @transform_4, window_bounds = array<i64: 1, 128>}, {transform_indices = @transform_5, window_bounds = array<i64: 8, 8>}, {transform_indices = @transform_6, window_bounds = array<i64: 8, 8>}]} {
    %c0 = arith.constant 0 : index
    %c0_0 = arith.constant 0 : index
    %0 = vector.load %arg1[%c0, %c0_0] : memref<8x256xf32, #tpu.memory_space<vmem>>, vector<8x256xf32>
    %c0_1 = arith.constant 0 : index
    %c0_2 = arith.constant 0 : index
    %1 = vector.load %arg2[%c0_1, %c0_2] : memref<256x128xf32, #tpu.memory_space<vmem>>, vector<256x128xf32>
    %cst = arith.constant dense<0.000000e+00> : vector<8x128xf32>
    %2 = tpu.matmul %0, %1, %cst {dimension_numbers = #tpu.dot_dimension_numbers<[1], [0], [0], [1], [0, 0, 1, 1], [], []>} : vector<8x256xf32>, vector<256x128xf32>, vector<8x128xf32> -> vector<8x128xf32>
    %c0_3 = arith.constant 0 : index
    %c0_4 = arith.constant 0 : index
    %3 = vector.load %arg3[%c0_3, %c0_4] : memref<1x128xf32, #tpu.memory_space<vmem>>, vector<1x128xf32>
    %4 = vector.broadcast %3 : vector<1x128xf32> to vector<8x128xf32>
    %5 = arith.addf %2, %4 : vector<8x128xf32>
    %cst_5 = arith.constant 0.000000e+00 : f32
    %6 = vector.broadcast %cst_5 : f32 to vector<8x128xf32>
    %7 = arith.maximumf %5, %6 : vector<8x128xf32>
    %c0_6 = arith.constant 0 : index
    %c0_7 = arith.constant 0 : index
    %8 = vector.load %arg4[%c0_6, %c0_7] : memref<128x128xf32, #tpu.memory_space<vmem>>, vector<128x128xf32>
    %cst_8 = arith.constant dense<0.000000e+00> : vector<8x128xf32>
    %9 = tpu.matmul %7, %8, %cst_8 {dimension_numbers = #tpu.dot_dimension_numbers<[1], [0], [0], [1], [0, 0, 1, 1], [], []>} : vector<8x128xf32>, vector<128x128xf32>, vector<8x128xf32> -> vector<8x128xf32>
    %c0_9 = arith.constant 0 : index
    %c0_10 = arith.constant 0 : index
    %10 = vector.load %arg5[%c0_9, %c0_10] : memref<1x128xf32, #tpu.memory_space<vmem>>, vector<1x128xf32>
    %11 = vector.broadcast %10 : vector<1x128xf32> to vector<8x128xf32>
    %12 = arith.addf %9, %11 : vector<8x128xf32>
    %13 = vector.extract_strided_slice %12 {offsets = [0, 0], sizes = [8, 8], strides = [1, 1]} : vector<8x128xf32> to vector<8x8xf32>
    %c0_11 = arith.constant 0 : index
    %c0_12 = arith.constant 0 : index
    %14 = vector.load %arg7[%c0_11, %c0_12] : memref<8x8xf32, #tpu.memory_space<vmem>>, vector<8x8xf32>
    tpu.vector_store %arg7[%c0_11, %c0_12], %13 {strides = array<i32>} : memref<8x8xf32, #tpu.memory_space<vmem>>, vector<8x8xf32>,
    %15 = tpu.iota {dimensions = array<i32: 1>} : vector<8x8xi32>
    %c4_i32 = arith.constant 4 : i32
    %16 = vector.broadcast %c4_i32 : i32 to vector<8x8xi32>
    %17 = arith.cmpi slt, %15, %16 : vector<8x8xi32>
    %cst_13 = arith.constant 0xFF800000 : f32
    %18 = vector.broadcast %cst_13 : f32 to vector<8x8xf32>
    %19 = arith.select %17, %13, %18 : vector<8x8xi1>, vector<8x8xf32>
    %cst_14 = arith.constant dense<0xFF800000> : vector<8xf32>
    %20 = vector.multi_reduction <maximumf>, %19, %cst_14 [1] : vector<8x8xf32> to vector<8xf32>
    %21 = vector.shape_cast %20 : vector<8xf32> to vector<8x1xf32>
    %22 = vector.broadcast %21 : vector<8x1xf32> to vector<8x8xf32>
    %23 = arith.subf %19, %22 : vector<8x8xf32>
    %24 = math.exp %23 : vector<8x8xf32>
    %cst_15 = arith.constant dense<0.000000e+00> : vector<8xf32>
    %25 = vector.multi_reduction <add>, %24, %cst_15 [1] : vector<8x8xf32> to vector<8xf32>
    %26 = vector.shape_cast %25 : vector<8xf32> to vector<8x1xf32>
    %27 = vector.broadcast %26 : vector<8x1xf32> to vector<8x8xf32>
    %28 = arith.divf %24, %27 : vector<8x8xf32>
    %c0_16 = arith.constant 0 : index
    %c0_17 = arith.constant 0 : index
    %29 = vector.load %arg6[%c0_16, %c0_17] : memref<8x8xf32, #tpu.memory_space<vmem>>, vector<8x8xf32>
    tpu.vector_store %arg6[%c0_16, %c0_17], %28 {strides = array<i32>} : memref<8x8xf32, #tpu.memory_space<vmem>>, vector<8x8xf32>,
    return
  }
  func.func @transform_0(%arg0: i32) -> (i32, i32) {
    %c7_i32 = arith.constant 7 : i32
    %c0_i32 = arith.constant 0 : i32
    return %arg0, %c7_i32 : i32, i32
  }
  func.func @transform_1(%arg0: i32) -> (i32, i32) {
    %c0_i32 = arith.constant 0 : i32
    %c0_i32_0 = arith.constant 0 : i32
    %c0_i32_1 = arith.constant 0 : i32
    return %c0_i32, %c0_i32_0 : i32, i32
  }
  func.func @transform_2(%arg0: i32) -> (i32, i32) {
    %c0_i32 = arith.constant 0 : i32
    %c0_i32_0 = arith.constant 0 : i32
    %c0_i32_1 = arith.constant 0 : i32
    return %c0_i32, %c0_i32_0 : i32, i32
  }
  func.func @transform_3(%arg0: i32) -> (i32, i32) {
    %c0_i32 = arith.constant 0 : i32
    %c0_i32_0 = arith.constant 0 : i32
    %c0_i32_1 = arith.constant 0 : i32
    return %c0_i32, %c0_i32_0 : i32, i32
  }
  func.func @transform_4(%arg0: i32) -> (i32, i32) {
    %c0_i32 = arith.constant 0 : i32
    %c0_i32_0 = arith.constant 0 : i32
    %c0_i32_1 = arith.constant 0 : i32
    return %c0_i32, %c0_i32_0 : i32, i32
  }
  func.func @transform_5(%arg0: i32) -> (i32, i32) {
    %c0_i32 = arith.constant 0 : i32
    %c0_i32_0 = arith.constant 0 : i32
    return %arg0, %c0_i32 : i32, i32
  }
  func.func @transform_6(%arg0: i32) -> (i32, i32) {
    %c0_i32 = arith.constant 0 : i32
    %c0_i32_0 = arith.constant 0 : i32
    return %arg0, %c0_i32 : i32, i32
  }
}

</mosaic_0001>

<llo_original>
// kernel: traj_simi_classification.1
$region0: #{traj_simi_classification.1}
  #allocation0 [shape = 'u32[]', space=smem, size = 0x4, offset = 0x4, fixed_abs, tag = 'smem constant byte address 0x4 - core index']
  #allocation1 [shape = 'u32[72,128]{1,0:T(1,128)}', space=vmem, size = 0x9000, scoped, tag = 'internal scratch']
  %s0 = inlined_call_operand.vmem [shape: f32[8,2048], index: 0, kind: input, shape index: {}]
  %s1 = inlined_call_operand.vmem [shape: f32[256,128], index: 1, kind: input, shape index: {}]
  %s2 = inlined_call_operand.vmem [shape: f32[1,128], index: 2, kind: input, shape index: {}]
  %s3 = inlined_call_operand.vmem [shape: f32[128,128], index: 3, kind: input, shape index: {}]
  %s4 = inlined_call_operand.vmem [shape: f32[1,128], index: 4, kind: input, shape index: {}]
  %s5 = inlined_call_operand.vmem [shape: f32[8,8], index: 5, kind: output, shape index: {0}]
  %s6 = inlined_call_operand.vmem [shape: f32[8,8], index: 6, kind: output, shape index: {1}]
  %7 = xla_tuple %s5, %s6
  %s8 = sld [smem:[#allocation0]]
  $region38: #{traj_simi_classification.1} parent=0
    _
  %s10 = ssub.s32 1, %s8
  %s11 = scalar_select 0, %s10, %s8
  // Predicated region
  $region2: #{traj_simi_classification.1} parent=0 // pred_check
    _
  $region3: #{traj_simi_classification.1} parent=0 // pred_check_branch
    %13 = sbr.rel (0) target = $region5
  $region4: #{traj_simi_classification.1} parent=0 // pred_region
    %s14 = scalar_lea.vmem %s0, 112
  $region5: #{traj_simi_classification.1} parent=0 // pred_fallthru
    _
  // Predicated region
  $region6: #{traj_simi_classification.1} parent=0 // pred_check
    _
  $region7: #{traj_simi_classification.1} parent=0 // pred_check_branch
    %16 = sbr.rel (0) target = $region9
  $region8: #{traj_simi_classification.1} parent=0 // pred_region
    _
  $region9: #{traj_simi_classification.1} parent=0 // pred_fallthru
    _
  // Predicated region
  $region10: #{traj_simi_classification.1} parent=0 // pred_check
    _
  $region11: #{traj_simi_classification.1} parent=0 // pred_check_branch
    %18 = sbr.rel (0) target = $region13
  $region12: #{traj_simi_classification.1} parent=0 // pred_region
    _
  $region13: #{traj_simi_classification.1} parent=0 // pred_fallthru
    _
  // Predicated region
  $region14: #{traj_simi_classification.1} parent=0 // pred_check
    _
  $region15: #{traj_simi_classification.1} parent=0 // pred_check_branch
    %20 = sbr.rel (0) target = $region17
  $region16: #{traj_simi_classification.1} parent=0 // pred_region
    _
  $region17: #{traj_simi_classification.1} parent=0 // pred_fallthru
    _
  // Predicated region
  $region18: #{traj_simi_classification.1} parent=0 // pred_check
    _
  $region19: #{traj_simi_classification.1} parent=0 // pred_check_branch
    %22 = sbr.rel (0) target = $region21
  $region20: #{traj_simi_classification.1} parent=0 // pred_region
    _
  $region21: #{traj_simi_classification.1} parent=0 // pred_fallthru
    _
  %s23 = scalar_lea.vmem %s0, 112
  %s24 = scalar_lea.vmem %s0, 112
  %v25 = vld [vmem:[%s24] sm:$0xff]
  %v26 = vld [vmem:[%s24 + $0x8] sm:$0xff]
  %v27 = vld [vmem:[%s1] sm:$0xff]
  %v28 = vld [vmem:[%s1 + $0x8] sm:$0xff]
  %v29 = vld [vmem:[%s1 + $0x10] sm:$0xff]
  %v30 = vld [vmem:[%s1 + $0x18] sm:$0xff]
  %v31 = vld [vmem:[%s1 + $0x20] sm:$0xff]
  %v32 = vld [vmem:[%s1 + $0x28] sm:$0xff]
  %v33 = vld [vmem:[%s1 + $0x30] sm:$0xff]
  %v34 = vld [vmem:[%s1 + $0x38] sm:$0xff]
  %v35 = vld [vmem:[%s1 + $0x40] sm:$0xff]
  %v36 = vld [vmem:[%s1 + $0x48] sm:$0xff]
  %v37 = vld [vmem:[%s1 + $0x50] sm:$0xff]
  %v38 = vld [vmem:[%s1 + $0x58] sm:$0xff]
  %v39 = vld [vmem:[%s1 + $0x60] sm:$0xff]
  %v40 = vld [vmem:[%s1 + $0x68] sm:$0xff]
  %v41 = vld [vmem:[%s1 + $0x70] sm:$0xff]
  %v42 = vld [vmem:[%s1 + $0x78] sm:$0xff]
  %v43 = vld [vmem:[%s1 + $0x80] sm:$0xff]
  %v44 = vld [vmem:[%s1 + $0x88] sm:$0xff]
  %v45 = vld [vmem:[%s1 + $0x90] sm:$0xff]
  %v46 = vld [vmem:[%s1 + $0x98] sm:$0xff]
  %v47 = vld [vmem:[%s1 + $0xa0] sm:$0xff]
  %v48 = vld [vmem:[%s1 + $0xa8] sm:$0xff]
  %v49 = vld [vmem:[%s1 + $0xb0] sm:$0xff]
  %v50 = vld [vmem:[%s1 + $0xb8] sm:$0xff]
  %v51 = vld [vmem:[%s1 + $0xc0] sm:$0xff]
  %v52 = vld [vmem:[%s1 + $0xc8] sm:$0xff]
  %v53 = vld [vmem:[%s1 + $0xd0] sm:$0xff]
  %v54 = vld [vmem:[%s1 + $0xd8] sm:$0xff]
  %v55 = vld [vmem:[%s1 + $0xe0] sm:$0xff]
  %v56 = vld [vmem:[%s1 + $0xe8] sm:$0xff]
  %v57 = vld [vmem:[%s1 + $0xf0] sm:$0xff]
  %v58 = vld [vmem:[%s1 + $0xf8] sm:$0xff]
  %v59 = vld [vmem:[%s2] sm:$0x1]
  %v61 = vperm.slane %v59, 0
  %63 = vmatpush.msra.mxu0 %v42
  %64 = vmatpush.msra.mxu0 %v41
  %65 = vmatpush.msra.mxu0 %v40
  %66 = vmatpush.msra.mxu0 %v39
  %67 = vmatpush.msra.mxu0 %v38
  %68 = vmatpush.msra.mxu0 %v37
  %69 = vmatpush.msra.mxu0 %v36
  %70 = vmatpush.msra.mxu0 %v35
  %71 = vmatpush.msra.mxu0 %v34
  %72 = vmatpush.msra.mxu0 %v33
  %73 = vmatpush.msra.mxu0 %v32
  %74 = vmatpush.msra.mxu0 %v31
  %75 = vmatpush.msra.mxu0 %v30
  %76 = vmatpush.msra.mxu0 %v29
  %77 = vmatpush.msra.mxu0 %v28
  %78 = vmatpush.msra.mxu0 %v27
  %79 = vmatmul.f32.gmra.mxu0 %v25
  %v80 = vpop.f32.mrf.mxu0
  %v81 = vadd.f32 %v61, %v80
  %82 = vdwg.mxu0
  %83 = vmatpush.msra.mxu0 %v58
  %84 = vmatpush.msra.mxu0 %v57
  %85 = vmatpush.msra.mxu0 %v56
  %86 = vmatpush.msra.mxu0 %v55
  %87 = vmatpush.msra.mxu0 %v54
  %88 = vmatpush.msra.mxu0 %v53
  %89 = vmatpush.msra.mxu0 %v52
  %90 = vmatpush.msra.mxu0 %v51
  %91 = vmatpush.msra.mxu0 %v50
  %92 = vmatpush.msra.mxu0 %v49
  %93 = vmatpush.msra.mxu0 %v48
  %94 = vmatpush.msra.mxu0 %v47
  %95 = vmatpush.msra.mxu0 %v46
  %96 = vmatpush.msra.mxu0 %v45
  %97 = vmatpush.msra.mxu0 %v44
  %98 = vmatpush.msra.mxu0 %v43
  %99 = vmatmul.f32.gmra.mxu0 %v26
  %v100 = vpop.f32.mrf.mxu0
  %v101 = vadd.f32 %v81, %v100
  %102 = vdwg.mxu0
  %v103 = vmax.f32 %v101, 0.0
  %v104 = vld [vmem:[%s3] sm:$0xff]
  %v105 = vld [vmem:[%s3 + $0x8] sm:$0xff]
  %v106 = vld [vmem:[%s3 + $0x10] sm:$0xff]
  %v107 = vld [vmem:[%s3 + $0x18] sm:$0xff]
  %v108 = vld [vmem:[%s3 + $0x20] sm:$0xff]
  %v109 = vld [vmem:[%s3 + $0x28] sm:$0xff]
  %v110 = vld [vmem:[%s3 + $0x30] sm:$0xff]
  %v111 = vld [vmem:[%s3 + $0x38] sm:$0xff]
  %v112 = vld [vmem:[%s3 + $0x40] sm:$0xff]
  %v113 = vld [vmem:[%s3 + $0x48] sm:$0xff]
  %v114 = vld [vmem:[%s3 + $0x50] sm:$0xff]
  %v115 = vld [vmem:[%s3 + $0x58] sm:$0xff]
  %v116 = vld [vmem:[%s3 + $0x60] sm:$0xff]
  %v117 = vld [vmem:[%s3 + $0x68] sm:$0xff]
  %v118 = vld [vmem:[%s3 + $0x70] sm:$0xff]
  %v119 = vld [vmem:[%s3 + $0x78] sm:$0xff]
  %v120 = vld [vmem:[%s4] sm:$0x1]
  %v122 = vperm.slane %v120, 0
  %124 = vmatpush.msra.mxu0 %v119
  %125 = vmatpush.msra.mxu0 %v118
  %126 = vmatpush.msra.mxu0 %v117
  %127 = vmatpush.msra.mxu0 %v116
  %128 = vmatpush.msra.mxu0 %v115
  %129 = vmatpush.msra.mxu0 %v114
  %130 = vmatpush.msra.mxu0 %v113
  %131 = vmatpush.msra.mxu0 %v112
  %132 = vmatpush.msra.mxu0 %v111
  %133 = vmatpush.msra.mxu0 %v110
  %134 = vmatpush.msra.mxu0 %v109
  %135 = vmatpush.msra.mxu0 %v108
  %136 = vmatpush.msra.mxu0 %v107
  %137 = vmatpush.msra.mxu0 %v106
  %138 = vmatpush.msra.mxu0 %v105
  %139 = vmatpush.msra.mxu0 %v104
  %140 = vmatmul.f32.gmra.mxu0 %v103
  %v141 = vpop.f32.mrf.mxu0
  %v142 = vadd.f32 %v122, %v141
  %143 = vdwg.mxu0
  %vm144 = vcmask 64512
  %145 = vst.msk [vmem:[%s6] sm:$0xff] %vm144, %v142
  %v146 = vlaneseq
  %v147 = vand.u32 %v146, 127
  %vm148 = vcmp.lt.s32.totalorder %v147, 4
  %v149 = vsel %vm148, %v142, -inf
  %v150 = vsel %vm144, %v149, -inf
  %151 = vmax.xlane.f32.xlu0 %v150
  %v152 = vpop.xlane.xlu0 %151
  %v153 = vsub.f32 %v149, %v152
  %v154 = vmul.f32 %v153, 1.442695
  %v155 = vpow.pop %v154
  %v156 = vsel %vm144, %v155, 0.0
  %157 = vadd.xlane.f32.xlu0 %v156
  %v158 = vpop.xlane.xlu0 %157
  %v159 = vrcp.pop %v158
  %v160 = vmul.f32 %v158, %v159
  %v161 = vsub.f32 1.0, %v160
  %v162 = vmul.f32 %v159, %v161
  %v163 = vadd.f32 %v159, %v162
  %vm164 = vweird.f32 %v158
  %vm165 = vweird.f32 %v159
  %vm166 = vmor %vm164, %vm165
  %v167 = vsel %vm166, %v159, %v163
  %v168 = vand.u32 2147483647, %v158
  %vm169 = vcmp.eq.f32.partialorder %v168, 8.507059e+37
  %v170 = vand.u32 %v158, 2147483648
  %v171 = vor.u32 1.1754944e-38, %v170
  %v172 = vsel %vm169, %v171, %v167
  %v173 = vmul.f32 %v155, %v172
  %174 = vst.msk [vmem:[%s5] sm:$0xff] %vm144, %v173
  // Predicated region
  $region22: #{traj_simi_classification.1} parent=0 // pred_check
    _
  $region23: #{traj_simi_classification.1} parent=0 // pred_check_branch
    %176 = sbr.rel (0) target = $region25
  $region24: #{traj_simi_classification.1} parent=0 // pred_region
    _
  $region25: #{traj_simi_classification.1} parent=0 // pred_fallthru
    _
  // Predicated region
  $region26: #{traj_simi_classification.1} parent=0 // pred_check
    _
  $region27: #{traj_simi_classification.1} parent=0 // pred_check_branch
    %178 = sbr.rel (0) target = $region29
  $region28: #{traj_simi_classification.1} parent=0 // pred_region
    _
  $region29: #{traj_simi_classification.1} parent=0 // pred_fallthru
    _
  // Predicated region
  $region30: #{traj_simi_classification.1} parent=0 // pred_check
    _
  $region31: #{traj_simi_classification.1} parent=0 // pred_check_branch
    %180 = sbr.rel (0) target = $region33
  $region32: #{traj_simi_classification.1} parent=0 // pred_region
    _
  $region33: #{traj_simi_classification.1} parent=0 // pred_fallthru
    _
  // Predicated region
  $region34: #{traj_simi_classification.1} parent=0 // pred_check
    _
  $region35: #{traj_simi_classification.1} parent=0 // pred_check_branch
    %182 = sbr.rel (0) target = $region37
  $region36: #{traj_simi_classification.1} parent=0 // pred_region
    _
  $region37: #{traj_simi_classification.1} parent=0 // pred_fallthru
    _

</llo_original>
